<compile_context>
chip_gen: v7x
topology: tpu7x:2x2x1
jax: 0.10.0
libtpu: 0.0.40
codegen_flags: <defaults>
</compile_context>

<pallas_src>
import functools

import jax
import jax.numpy as jnp
from jax.experimental import pallas as pl
from jax.experimental.pallas import tpu as pltpu

INPUT_SIZE = 7
HIDDEN_SIZE = 7
NUM_LAYERS = 1
BATCH_SIZE = 1
SEQ_LEN = 8

# Row offsets of the sections inside the packed input slab. Each section is
# padded to an 8-row x 8-lane block so every kernel-side slice starts on a
# sublane-tile boundary.
_SEC = 8
_OFF_X = 0 * _SEC       # x            (seq, input)
_OFF_XT = 1 * _SEC      # x^T          (input, seq)
_OFF_WIH_T = 2 * _SEC   # W_ih^T       (input, hidden)
_OFF_WIH = 3 * _SEC     # W_ih         (hidden, input)
_OFF_WHH = 4 * _SEC     # W_hh         (hidden, hidden)
_OFF_WHH_T = 5 * _SEC   # W_hh^T       (hidden, hidden)
_OFF_B_ROW = 6 * _SEC   # b_ih + b_hh  (1, hidden)
_OFF_B_COL = 7 * _SEC   # b_ih + b_hh  (hidden, 1)
_SLAB_ROWS = 8 * _SEC
_SLAB_COLS = 8


def rnn_kernel(slab_ref, out_ref, *, seq, input_size, hidden):
    """Single-layer Elman RNN (tanh), batch=1, fully unrolled, MXU-free recurrence."""
    s, i, h = seq, input_size, hidden

    x = slab_ref[_OFF_X:_OFF_X + s, 0:i]              # (S, I)
    x_t = slab_ref[_OFF_XT:_OFF_XT + i, 0:s]          # (I, S)
    w_ih_t = slab_ref[_OFF_WIH_T:_OFF_WIH_T + i, 0:h]  # (I, H)
    w_ih = slab_ref[_OFF_WIH:_OFF_WIH + h, 0:i]        # (H, I)
    w_hh = slab_ref[_OFF_WHH:_OFF_WHH + h, 0:h]        # (H, H)
    w_hh_t = slab_ref[_OFF_WHH_T:_OFF_WHH_T + h, 0:h]  # (H, H)
    b_row = slab_ref[_OFF_B_ROW:_OFF_B_ROW + 1, 0:h]   # (1, H)
    b_col = slab_ref[_OFF_B_COL:_OFF_B_COL + h, 0:1]   # (H, 1)

    # Hoisted input projection in BOTH layouts (two small MXU matmuls) so the
    # recurrence never needs a sublane<->lane relayout.
    xproj = jnp.dot(x, w_ih_t, preferred_element_type=jnp.float32) + b_row    # (S, H)
    xproj_t = jnp.dot(w_ih, x_t, preferred_element_type=jnp.float32) + b_col  # (H, S)

    # Peeled step 0: h_{-1} = 0  =>  h_0 = tanh(xproj[0]).
    h_row = jnp.tanh(xproj[0:1, :])     # (1, H)
    h_col = jnp.tanh(xproj_t[:, 0:1])   # (H, 1)
    out_ref[0:1, :] = h_row.astype(out_ref.dtype)

    # Fully unrolled recurrence.  Per step:
    #   row form:    pre[0,j] = sum_i W_hh^T[i,j] * h_col[i]   (sublane reduce)
    #   column form: pre[j,0] = sum_i W_hh[j,i]   * h_row[i]   (lane reduce)
    # Both are VPU broadcast-mul + XLU reduce + EUP tanh; no MXU on the chain.
    for t in range(1, s):
        pre_row = jnp.sum(w_hh_t * h_col, axis=0, keepdims=True) + xproj[t:t + 1, :]   # (1, H)
        pre_col = jnp.sum(w_hh * h_row, axis=1, keepdims=True) + xproj_t[:, t:t + 1]   # (H, 1)
        h_row = jnp.tanh(pre_row)
        h_col = jnp.tanh(pre_col)
        # Static-index per-step store (idle vst slot, overlaps later steps).
        out_ref[t:t + 1, :] = h_row.astype(out_ref.dtype)


def _pad_block(a, rows=_SEC, cols=_SLAB_COLS):
    r, c = a.shape
    return jnp.pad(a.astype(jnp.float32), ((0, rows - r), (0, cols - c)))


def prepare_params(w_ih, w_hh, b_ih, b_hh):
    """One-time parameter prep: weights in both layouts, folded bias, padded slab."""
    w_ih = jnp.asarray(w_ih, jnp.float32)
    w_hh = jnp.asarray(w_hh, jnp.float32)
    b = jnp.asarray(b_ih, jnp.float32) + jnp.asarray(b_hh, jnp.float32)
    hidden = w_hh.shape[0]
    return jnp.concatenate(
        [
            _pad_block(w_ih.T),                # W_ih^T  (I, H)
            _pad_block(w_ih),                  # W_ih    (H, I)
            _pad_block(w_hh),                  # W_hh    (H, H)
            _pad_block(w_hh.T),                # W_hh^T  (H, H)
            _pad_block(b.reshape(1, hidden)),  # bias row (1, H)
            _pad_block(b.reshape(hidden, 1)),  # bias col (H, 1)
        ],
        axis=0,
    )  # (48, 8) f32


@jax.jit
def rnn_forward(x, param_slab):
    """x: (seq, batch=1, input). Returns (seq*batch, hidden) == out.view(-1, H)."""
    seq_len, batch, input_size = x.shape
    assert batch == 1, "kernel specialised to the module's batch_size=1"
    assert seq_len * batch <= _SEC and input_size <= _SLAB_COLS
    hidden = HIDDEN_SIZE

    x2d = x.reshape(seq_len * batch, input_size).astype(jnp.float32)  # (S, I)
    slab = jnp.concatenate([_pad_block(x2d), _pad_block(x2d.T), param_slab], axis=0)

    kernel = functools.partial(
        rnn_kernel, seq=seq_len * batch, input_size=input_size, hidden=hidden
    )
    out = pl.pallas_call(
        kernel,
        out_shape=jax.ShapeDtypeStruct((seq_len * batch, hidden), jnp.float32),
        in_specs=[pl.BlockSpec(memory_space=pltpu.MemorySpace.VMEM)],
        out_specs=pl.BlockSpec(memory_space=pltpu.MemorySpace.VMEM),
    )(slab)
    return out


def rnn_reference(x, w_ih, w_hh, b_ih, b_hh):
    """Pure-JAX reference (matches torch.nn.RNN forward with h0 = zeros)."""
    seq_len, batch, _ = x.shape
    hidden = w_hh.shape[0]
    h = jnp.zeros((batch, hidden), jnp.float32)
    outs = []
    for t in range(seq_len):
        h = jnp.tanh(x[t] @ w_ih.T + b_ih + h @ w_hh.T + b_hh)
        outs.append(h)
    return jnp.stack(outs, axis=0).reshape(-1, hidden)


if __name__ == "__main__":
    key = jax.random.PRNGKey(0)
    k_x, k_wih, k_whh, k_bih, k_bhh = jax.random.split(key, 5)

    # Same U(-1/sqrt(H), 1/sqrt(H)) init scheme as torch.nn.RNN.
    bound = 1.0 / (HIDDEN_SIZE ** 0.5)
    w_ih = jax.random.uniform(k_wih, (HIDDEN_SIZE, INPUT_SIZE), jnp.float32, -bound, bound)
    w_hh = jax.random.uniform(k_whh, (HIDDEN_SIZE, HIDDEN_SIZE), jnp.float32, -bound, bound)
    b_ih = jax.random.uniform(k_bih, (HIDDEN_SIZE,), jnp.float32, -bound, bound)
    b_hh = jax.random.uniform(k_bhh, (HIDDEN_SIZE,), jnp.float32, -bound, bound)

    # Input: (seq_len, batch, input_size) — time-major, as nn.RNN (batch_first=False).
    x = jax.random.normal(k_x, (SEQ_LEN, BATCH_SIZE, INPUT_SIZE), jnp.float32)

    # One-time parameter prep, then the jitted forward.
    param_slab = prepare_params(w_ih, w_hh, b_ih, b_hh)
    out = rnn_forward(x, param_slab)
    out = jax.block_until_ready(out)

    ref = rnn_reference(x, w_ih, w_hh, b_ih, b_hh)
    assert out.shape == (SEQ_LEN * BATCH_SIZE, HIDDEN_SIZE), out.shape
    assert jnp.allclose(out, ref, atol=1e-5, rtol=1e-5), "mismatch vs reference"

    print("KERNEL_OK")
</pallas_src>

<mosaic_0001>
module attributes {stable_mosaic.version = 11 : i64} {
  func.func @rnn_kernel(%arg0: memref<64x8xf32, #tpu.memory_space<vmem>>, %arg1: memref<8x7xf32, #tpu.memory_space<vmem>>) attributes {dimension_semantics = [], scalar_prefetch = 0 : i64, scratch_operands = 0 : i64, tpu.core_type = #tpu.core_type<tc>} {
    %c0 = arith.constant 0 : index
    %c0_0 = arith.constant 0 : index
    %0 = vector.load %arg0[%c0, %c0_0] : memref<64x8xf32, #tpu.memory_space<vmem>>, vector<8x7xf32>
    %c8 = arith.constant 8 : index
    %c0_1 = arith.constant 0 : index
    %1 = vector.load %arg0[%c8, %c0_1] : memref<64x8xf32, #tpu.memory_space<vmem>>, vector<7x8xf32>
    %c16 = arith.constant 16 : index
    %c0_2 = arith.constant 0 : index
    %2 = vector.load %arg0[%c16, %c0_2] : memref<64x8xf32, #tpu.memory_space<vmem>>, vector<7x7xf32>
    %c24 = arith.constant 24 : index
    %c0_3 = arith.constant 0 : index
    %3 = vector.load %arg0[%c24, %c0_3] : memref<64x8xf32, #tpu.memory_space<vmem>>, vector<7x7xf32>
    %c32 = arith.constant 32 : index
    %c0_4 = arith.constant 0 : index
    %4 = vector.load %arg0[%c32, %c0_4] : memref<64x8xf32, #tpu.memory_space<vmem>>, vector<7x7xf32>
    %c40 = arith.constant 40 : index
    %c0_5 = arith.constant 0 : index
    %5 = vector.load %arg0[%c40, %c0_5] : memref<64x8xf32, #tpu.memory_space<vmem>>, vector<7x7xf32>
    %c48 = arith.constant 48 : index
    %c0_6 = arith.constant 0 : index
    %6 = vector.load %arg0[%c48, %c0_6] : memref<64x8xf32, #tpu.memory_space<vmem>>, vector<1x7xf32>
    %c56 = arith.constant 56 : index
    %c0_7 = arith.constant 0 : index
    %7 = vector.load %arg0[%c56, %c0_7] : memref<64x8xf32, #tpu.memory_space<vmem>>, vector<7x1xf32>
    %cst = arith.constant dense<0.000000e+00> : vector<8x7xf32>
    %8 = tpu.matmul %0, %2, %cst {dimension_numbers = #tpu.dot_dimension_numbers<[1], [0], [0], [1], [0, 0, 1, 1], [], []>} : vector<8x7xf32>, vector<7x7xf32>, vector<8x7xf32> -> vector<8x7xf32>
    %9 = vector.broadcast %6 : vector<1x7xf32> to vector<8x7xf32>
    %10 = arith.addf %8, %9 : vector<8x7xf32>
    %cst_8 = arith.constant dense<0.000000e+00> : vector<7x8xf32>
    %11 = tpu.matmul %3, %1, %cst_8 {dimension_numbers = #tpu.dot_dimension_numbers<[1], [0], [0], [1], [0, 0, 1, 1], [], []>} : vector<7x7xf32>, vector<7x8xf32>, vector<7x8xf32> -> vector<7x8xf32>
    %12 = vector.broadcast %7 : vector<7x1xf32> to vector<7x8xf32>
    %13 = arith.addf %11, %12 : vector<7x8xf32>
    %14 = vector.extract_strided_slice %10 {offsets = [0, 0], sizes = [1, 7], strides = [1, 1]} : vector<8x7xf32> to vector<1x7xf32>
    %15 = math.tanh %14 : vector<1x7xf32>
    %16 = vector.extract_strided_slice %13 {offsets = [0, 0], sizes = [7, 1], strides = [1, 1]} : vector<7x8xf32> to vector<7x1xf32>
    %17 = math.tanh %16 : vector<7x1xf32>
    %c0_9 = arith.constant 0 : index
    %c0_10 = arith.constant 0 : index
    %18 = vector.load %arg1[%c0_9, %c0_10] : memref<8x7xf32, #tpu.memory_space<vmem>>, vector<1x7xf32>
    tpu.vector_store %arg1[%c0_9, %c0_10], %15 {strides = array<i32>} : memref<8x7xf32, #tpu.memory_space<vmem>>, vector<1x7xf32>,
    %19 = vector.broadcast %17 : vector<7x1xf32> to vector<7x7xf32>
    %20 = arith.mulf %5, %19 : vector<7x7xf32>
    %cst_11 = arith.constant dense<0.000000e+00> : vector<7xf32>
    %21 = vector.multi_reduction <add>, %20, %cst_11 [0] : vector<7x7xf32> to vector<7xf32>
    %22 = vector.shape_cast %21 : vector<7xf32> to vector<1x7xf32>
    %23 = vector.extract_strided_slice %10 {offsets = [1, 0], sizes = [1, 7], strides = [1, 1]} : vector<8x7xf32> to vector<1x7xf32>
    %24 = arith.addf %22, %23 : vector<1x7xf32>
    %25 = vector.broadcast %15 : vector<1x7xf32> to vector<7x7xf32>
    %26 = arith.mulf %4, %25 : vector<7x7xf32>
    %cst_12 = arith.constant dense<0.000000e+00> : vector<7xf32>
    %27 = vector.multi_reduction <add>, %26, %cst_12 [1] : vector<7x7xf32> to vector<7xf32>
    %28 = vector.shape_cast %27 : vector<7xf32> to vector<7x1xf32>
    %29 = vector.extract_strided_slice %13 {offsets = [0, 1], sizes = [7, 1], strides = [1, 1]} : vector<7x8xf32> to vector<7x1xf32>
    %30 = arith.addf %28, %29 : vector<7x1xf32>
    %31 = math.tanh %24 : vector<1x7xf32>
    %32 = math.tanh %30 : vector<7x1xf32>
    %c1 = arith.constant 1 : index
    %c0_13 = arith.constant 0 : index
    %33 = vector.load %arg1[%c1, %c0_13] : memref<8x7xf32, #tpu.memory_space<vmem>>, vector<1x7xf32>
    tpu.vector_store %arg1[%c1, %c0_13], %31 {strides = array<i32>} : memref<8x7xf32, #tpu.memory_space<vmem>>, vector<1x7xf32>,
    %34 = vector.broadcast %32 : vector<7x1xf32> to vector<7x7xf32>
    %35 = arith.mulf %5, %34 : vector<7x7xf32>
    %cst_14 = arith.constant dense<0.000000e+00> : vector<7xf32>
    %36 = vector.multi_reduction <add>, %35, %cst_14 [0] : vector<7x7xf32> to vector<7xf32>
    %37 = vector.shape_cast %36 : vector<7xf32> to vector<1x7xf32>
    %38 = vector.extract_strided_slice %10 {offsets = [2, 0], sizes = [1, 7], strides = [1, 1]} : vector<8x7xf32> to vector<1x7xf32>
    %39 = arith.addf %37, %38 : vector<1x7xf32>
    %40 = vector.broadcast %31 : vector<1x7xf32> to vector<7x7xf32>
    %41 = arith.mulf %4, %40 : vector<7x7xf32>
    %cst_15 = arith.constant dense<0.000000e+00> : vector<7xf32>
    %42 = vector.multi_reduction <add>, %41, %cst_15 [1] : vector<7x7xf32> to vector<7xf32>
    %43 = vector.shape_cast %42 : vector<7xf32> to vector<7x1xf32>
    %44 = vector.extract_strided_slice %13 {offsets = [0, 2], sizes = [7, 1], strides = [1, 1]} : vector<7x8xf32> to vector<7x1xf32>
    %45 = arith.addf %43, %44 : vector<7x1xf32>
    %46 = math.tanh %39 : vector<1x7xf32>
    %47 = math.tanh %45 : vector<7x1xf32>
    %c2 = arith.constant 2 : index
    %c0_16 = arith.constant 0 : index
    %48 = vector.load %arg1[%c2, %c0_16] : memref<8x7xf32, #tpu.memory_space<vmem>>, vector<1x7xf32>
    tpu.vector_store %arg1[%c2, %c0_16], %46 {strides = array<i32>} : memref<8x7xf32, #tpu.memory_space<vmem>>, vector<1x7xf32>,
    %49 = vector.broadcast %47 : vector<7x1xf32> to vector<7x7xf32>
    %50 = arith.mulf %5, %49 : vector<7x7xf32>
    %cst_17 = arith.constant dense<0.000000e+00> : vector<7xf32>
    %51 = vector.multi_reduction <add>, %50, %cst_17 [0] : vector<7x7xf32> to vector<7xf32>
    %52 = vector.shape_cast %51 : vector<7xf32> to vector<1x7xf32>
    %53 = vector.extract_strided_slice %10 {offsets = [3, 0], sizes = [1, 7], strides = [1, 1]} : vector<8x7xf32> to vector<1x7xf32>
    %54 = arith.addf %52, %53 : vector<1x7xf32>
    %55 = vector.broadcast %46 : vector<1x7xf32> to vector<7x7xf32>
    %56 = arith.mulf %4, %55 : vector<7x7xf32>
    %cst_18 = arith.constant dense<0.000000e+00> : vector<7xf32>
    %57 = vector.multi_reduction <add>, %56, %cst_18 [1] : vector<7x7xf32> to vector<7xf32>
    %58 = vector.shape_cast %57 : vector<7xf32> to vector<7x1xf32>
    %59 = vector.extract_strided_slice %13 {offsets = [0, 3], sizes = [7, 1], strides = [1, 1]} : vector<7x8xf32> to vector<7x1xf32>
    %60 = arith.addf %58, %59 : vector<7x1xf32>
    %61 = math.tanh %54 : vector<1x7xf32>
    %62 = math.tanh %60 : vector<7x1xf32>
    %c3 = arith.constant 3 : index
    %c0_19 = arith.constant 0 : index
    %63 = vector.load %arg1[%c3, %c0_19] : memref<8x7xf32, #tpu.memory_space<vmem>>, vector<1x7xf32>
    tpu.vector_store %arg1[%c3, %c0_19], %61 {strides = array<i32>} : memref<8x7xf32, #tpu.memory_space<vmem>>, vector<1x7xf32>,
    %64 = vector.broadcast %62 : vector<7x1xf32> to vector<7x7xf32>
    %65 = arith.mulf %5, %64 : vector<7x7xf32>
    %cst_20 = arith.constant dense<0.000000e+00> : vector<7xf32>
    %66 = vector.multi_reduction <add>, %65, %cst_20 [0] : vector<7x7xf32> to vector<7xf32>
    %67 = vector.shape_cast %66 : vector<7xf32> to vector<1x7xf32>
    %68 = vector.extract_strided_slice %10 {offsets = [4, 0], sizes = [1, 7], strides = [1, 1]} : vector<8x7xf32> to vector<1x7xf32>
    %69 = arith.addf %67, %68 : vector<1x7xf32>
    %70 = vector.broadcast %61 : vector<1x7xf32> to vector<7x7xf32>
    %71 = arith.mulf %4, %70 : vector<7x7xf32>
    %cst_21 = arith.constant dense<0.000000e+00> : vector<7xf32>
    %72 = vector.multi_reduction <add>, %71, %cst_21 [1] : vector<7x7xf32> to vector<7xf32>
    %73 = vector.shape_cast %72 : vector<7xf32> to vector<7x1xf32>
    %74 = vector.extract_strided_slice %13 {offsets = [0, 4], sizes = [7, 1], strides = [1, 1]} : vector<7x8xf32> to vector<7x1xf32>
    %75 = arith.addf %73, %74 : vector<7x1xf32>
    %76 = math.tanh %69 : vector<1x7xf32>
    %77 = math.tanh %75 : vector<7x1xf32>
    %c4 = arith.constant 4 : index
    %c0_22 = arith.constant 0 : index
    %78 = vector.load %arg1[%c4, %c0_22] : memref<8x7xf32, #tpu.memory_space<vmem>>, vector<1x7xf32>
    tpu.vector_store %arg1[%c4, %c0_22], %76 {strides = array<i32>} : memref<8x7xf32, #tpu.memory_space<vmem>>, vector<1x7xf32>,
    %79 = vector.broadcast %77 : vector<7x1xf32> to vector<7x7xf32>
    %80 = arith.mulf %5, %79 : vector<7x7xf32>
    %cst_23 = arith.constant dense<0.000000e+00> : vector<7xf32>
    %81 = vector.multi_reduction <add>, %80, %cst_23 [0] : vector<7x7xf32> to vector<7xf32>
    %82 = vector.shape_cast %81 : vector<7xf32> to vector<1x7xf32>
    %83 = vector.extract_strided_slice %10 {offsets = [5, 0], sizes = [1, 7], strides = [1, 1]} : vector<8x7xf32> to vector<1x7xf32>
    %84 = arith.addf %82, %83 : vector<1x7xf32>
    %85 = vector.broadcast %76 : vector<1x7xf32> to vector<7x7xf32>
    %86 = arith.mulf %4, %85 : vector<7x7xf32>
    %cst_24 = arith.constant dense<0.000000e+00> : vector<7xf32>
    %87 = vector.multi_reduction <add>, %86, %cst_24 [1] : vector<7x7xf32> to vector<7xf32>
    %88 = vector.shape_cast %87 : vector<7xf32> to vector<7x1xf32>
    %89 = vector.extract_strided_slice %13 {offsets = [0, 5], sizes = [7, 1], strides = [1, 1]} : vector<7x8xf32> to vector<7x1xf32>
    %90 = arith.addf %88, %89 : vector<7x1xf32>
    %91 = math.tanh %84 : vector<1x7xf32>
    %92 = math.tanh %90 : vector<7x1xf32>
    %c5 = arith.constant 5 : index
    %c0_25 = arith.constant 0 : index
    %93 = vector.load %arg1[%c5, %c0_25] : memref<8x7xf32, #tpu.memory_space<vmem>>, vector<1x7xf32>
    tpu.vector_store %arg1[%c5, %c0_25], %91 {strides = array<i32>} : memref<8x7xf32, #tpu.memory_space<vmem>>, vector<1x7xf32>,
    %94 = vector.broadcast %92 : vector<7x1xf32> to vector<7x7xf32>
    %95 = arith.mulf %5, %94 : vector<7x7xf32>
    %cst_26 = arith.constant dense<0.000000e+00> : vector<7xf32>
    %96 = vector.multi_reduction <add>, %95, %cst_26 [0] : vector<7x7xf32> to vector<7xf32>
    %97 = vector.shape_cast %96 : vector<7xf32> to vector<1x7xf32>
    %98 = vector.extract_strided_slice %10 {offsets = [6, 0], sizes = [1, 7], strides = [1, 1]} : vector<8x7xf32> to vector<1x7xf32>
    %99 = arith.addf %97, %98 : vector<1x7xf32>
    %100 = vector.broadcast %91 : vector<1x7xf32> to vector<7x7xf32>
    %101 = arith.mulf %4, %100 : vector<7x7xf32>
    %cst_27 = arith.constant dense<0.000000e+00> : vector<7xf32>
    %102 = vector.multi_reduction <add>, %101, %cst_27 [1] : vector<7x7xf32> to vector<7xf32>
    %103 = vector.shape_cast %102 : vector<7xf32> to vector<7x1xf32>
    %104 = vector.extract_strided_slice %13 {offsets = [0, 6], sizes = [7, 1], strides = [1, 1]} : vector<7x8xf32> to vector<7x1xf32>
    %105 = arith.addf %103, %104 : vector<7x1xf32>
    %106 = math.tanh %99 : vector<1x7xf32>
    %107 = math.tanh %105 : vector<7x1xf32>
    %c6 = arith.constant 6 : index
    %c0_28 = arith.constant 0 : index
    %108 = vector.load %arg1[%c6, %c0_28] : memref<8x7xf32, #tpu.memory_space<vmem>>, vector<1x7xf32>
    tpu.vector_store %arg1[%c6, %c0_28], %106 {strides = array<i32>} : memref<8x7xf32, #tpu.memory_space<vmem>>, vector<1x7xf32>,
    %109 = vector.broadcast %107 : vector<7x1xf32> to vector<7x7xf32>
    %110 = arith.mulf %5, %109 : vector<7x7xf32>
    %cst_29 = arith.constant dense<0.000000e+00> : vector<7xf32>
    %111 = vector.multi_reduction <add>, %110, %cst_29 [0] : vector<7x7xf32> to vector<7xf32>
    %112 = vector.shape_cast %111 : vector<7xf32> to vector<1x7xf32>
    %113 = vector.extract_strided_slice %10 {offsets = [7, 0], sizes = [1, 7], strides = [1, 1]} : vector<8x7xf32> to vector<1x7xf32>
    %114 = arith.addf %112, %113 : vector<1x7xf32>
    %115 = math.tanh %114 : vector<1x7xf32>
    %c7 = arith.constant 7 : index
    %c0_30 = arith.constant 0 : index
    %116 = vector.load %arg1[%c7, %c0_30] : memref<8x7xf32, #tpu.memory_space<vmem>>, vector<1x7xf32>
    tpu.vector_store %arg1[%c7, %c0_30], %115 {strides = array<i32>} : memref<8x7xf32, #tpu.memory_space<vmem>>, vector<1x7xf32>,
    return
  }
}

</mosaic_0001>

<llo_original>
// kernel: rnn_forward.1
$region0: #{rnn_forward.1}
  #allocation0 [shape = 'u32[]', space=smem, size = 0x4, offset = 0x4, fixed_abs, tag = 'smem constant byte address 0x4 - core index']
  #allocation1 [shape = 'u32[144,128]{1,0:T(1,128)}', space=vmem, size = 0x12000, scoped, tag = 'internal scratch']
  %s0 = inlined_call_operand.vmem [shape: f32[64,8], index: 0, kind: input, shape index: {}]
  %s1 = inlined_call_operand.hbm [shape: f32[8,7], index: 1, kind: output, shape index: {}]
  %s2 = sld [smem:[#allocation0]]
  $region14: #{rnn_forward.1} parent=0
    _
  %s4 = ssub.s32 1, %s2
  %s5 = scalar_select 0, %s4, %s2
  $region1: #{rnn_forward.1} parent=0
    #allocation2 [shape = 'u8[4096]{0}', space=vmem, size = 0x1000, scoped, tag = 'output window, operand 0, single buffered']
    #allocation3 [shape = 's32[1]{0}', space=sflag, size = 0x4, scoped, tag = 'scoped memory for rnn_forward.1']
    %6 = vsyncpa [#allocation3], 0
    // Predicated region
    $region2: #{rnn_forward.1} parent=1 // pred_check
      _
    $region3: #{rnn_forward.1} parent=1 // pred_check_branch
      %8 = sbr.rel (0) target = $region5
    $region4: #{rnn_forward.1} parent=1 // pred_region
      _
    $region5: #{rnn_forward.1} parent=1 // pred_fallthru
      _
    %v9 = vld [vmem:[%s0] sm:$0xff]
    %v10 = vld [vmem:[%s0 + $0x8] sm:$0x7f]
    %v11 = vld [vmem:[%s0 + $0x10] sm:$0x7f]
    %v12 = vld [vmem:[%s0 + $0x18] sm:$0x7f]
    %v13 = vld [vmem:[%s0 + $0x20] sm:$0x7f]
    %v14 = vld [vmem:[%s0 + $0x28] sm:$0x7f]
    %v15 = vld [vmem:[%s0 + $0x30] sm:$0x1]
    %v16 = vld [vmem:[%s0 + $0x38] sm:$0x7f]
    %v17 = vlaneseq
    %v18 = vshrl.u32 %v17, 7
    %v19 = vsub.s32 0, %v18
    %v20 = vrot.slane %v15, %v19
    %vm21 = vcmask 56320
    %v23 = vsel %vm21, %v9, 0
    %vm25 = vcmask 1046528
    %v27 = vsel %vm25, %v11, 0
    %29 = vmatprep.subr.mxu0 0.0
    %30 = vmatpush1.msra.mxu0 %v27
    %31 = vmatprep.subr.mxu0 0.0
    %32 = vmatpush1.msra.mxu0 0.0
    %33 = vmatprep.subr.mxu0 0.0
    %34 = vmatpush1.msra.mxu0 0.0
    %35 = vmatprep.subr.mxu0 0.0
    %36 = vmatpush1.msra.mxu0 0.0
    %37 = vmatprep.subr.mxu0 0.0
    %38 = vmatpush1.msra.mxu0 0.0
    %39 = vmatprep.subr.mxu0 0.0
    %40 = vmatpush1.msra.mxu0 0.0
    %41 = vmatprep.subr.mxu0 0.0
    %42 = vmatpush1.msra.mxu0 0.0
    %43 = vmatprep.subr.mxu0 0.0
    %44 = vmatpush1.msra.mxu0 0.0
    %45 = vmatprep.subr.mxu0 0.0
    %46 = vmatpush1.msra.mxu0 0.0
    %47 = vmatprep.subr.mxu0 0.0
    %48 = vmatpush1.msra.mxu0 0.0
    %49 = vmatprep.subr.mxu0 0.0
    %50 = vmatpush1.msra.mxu0 0.0
    %51 = vmatprep.subr.mxu0 0.0
    %52 = vmatpush1.msra.mxu0 0.0
    %53 = vmatprep.subr.mxu0 0.0
    %54 = vmatpush1.msra.mxu0 0.0
    %55 = vmatprep.subr.mxu0 0.0
    %56 = vmatpush1.msra.mxu0 0.0
    %57 = vmatprep.subr.mxu0 0.0
    %58 = vmatpush1.msra.mxu0 0.0
    %59 = vmatprep.subr.mxu0 0.0
    %60 = vmatpush1.msra.mxu0 0.0
    %61 = vmatprep.subr.mxu0 0.0
    %62 = vmatpush1.msra.mxu0 0.0
    %63 = vmatprep.subr.mxu0 0.0
    %64 = vmatpush1.msra.mxu0 0.0
    %65 = vmatprep.subr.mxu0 0.0
    %66 = vmatpush1.msra.mxu0 0.0
    %67 = vmatprep.subr.mxu0 0.0
    %68 = vmatpush1.msra.mxu0 0.0
    %69 = vmatprep.subr.mxu0 0.0
    %70 = vmatpush1.msra.mxu0 0.0
    %71 = vmatprep.subr.mxu0 0.0
    %72 = vmatpush1.msra.mxu0 0.0
    %73 = vmatprep.subr.mxu0 0.0
    %74 = vmatpush1.msra.mxu0 0.0
    %75 = vmatprep.subr.mxu0 0.0
    %76 = vmatpush1.msra.mxu0 0.0
    %77 = vmatprep.subr.mxu0 0.0
    %78 = vmatpush1.msra.mxu0 0.0
    %79 = vmatprep.subr.mxu0 0.0
    %80 = vmatpush1.msra.mxu0 0.0
    %81 = vmatprep.subr.mxu0 0.0
    %82 = vmatpush1.msra.mxu0 0.0
    %83 = vmatprep.subr.mxu0 0.0
    %84 = vmatpush1.msra.mxu0 0.0
    %85 = vmatprep.subr.mxu0 0.0
    %86 = vmatpush1.msra.mxu0 0.0
    %87 = vmatprep.subr.mxu0 0.0
    %88 = vmatpush1.msra.mxu0 0.0
    %89 = vmatprep.subr.mxu0 0.0
    %90 = vmatpush1.msra.mxu0 0.0
    %91 = vmatprep.subr.mxu0 0.0
    %92 = vmatpush1.msra.mxu0 0.0
    %93 = vmatprep.mubr.f32.mxu0 0.0
    %94 = vmatmul.mubr.f32.gmra.mrb[0].mxu0 %v23
    %v95 = vpop.f32.mrb[0].mxu0
    %v96 = vadd.f32 %v20, %v95
    %v97 = vpop.f32.mrb[0].mxu0
    %98 = vdwg.mxu0
    %100 = vset.pattern.permute.xlu0 0
    %101 = vperm.xlu0 %100, %v16
    %v102 = vpop.permute.xlu0 %101
    %v105 = vsel %vm21, %v12, 0
    %v108 = vsel %vm25, %v10, 0
    %110 = vmatprep.subr.mxu0 0.0
    %111 = vmatpush1.msra.mxu0 %v108
    %112 = vmatprep.subr.mxu0 0.0
    %113 = vmatpush1.msra.mxu0 0.0
    %114 = vmatprep.subr.mxu0 0.0
    %115 = vmatpush1.msra.mxu0 0.0
    %116 = vmatprep.subr.mxu0 0.0
    %117 = vmatpush1.msra.mxu0 0.0
    %118 = vmatprep.subr.mxu0 0.0
    %119 = vmatpush1.msra.mxu0 0.0
    %120 = vmatprep.subr.mxu0 0.0
    %121 = vmatpush1.msra.mxu0 0.0
    %122 = vmatprep.subr.mxu0 0.0
    %123 = vmatpush1.msra.mxu0 0.0
    %124 = vmatprep.subr.mxu0 0.0
    %125 = vmatpush1.msra.mxu0 0.0
    %126 = vmatprep.subr.mxu0 0.0
    %127 = vmatpush1.msra.mxu0 0.0
    %128 = vmatprep.subr.mxu0 0.0
    %129 = vmatpush1.msra.mxu0 0.0
    %130 = vmatprep.subr.mxu0 0.0
    %131 = vmatpush1.msra.mxu0 0.0
    %132 = vmatprep.subr.mxu0 0.0
    %133 = vmatpush1.msra.mxu0 0.0
    %134 = vmatprep.subr.mxu0 0.0
    %135 = vmatpush1.msra.mxu0 0.0
    %136 = vmatprep.subr.mxu0 0.0
    %137 = vmatpush1.msra.mxu0 0.0
    %138 = vmatprep.subr.mxu0 0.0
    %139 = vmatpush1.msra.mxu0 0.0
    %140 = vmatprep.subr.mxu0 0.0
    %141 = vmatpush1.msra.mxu0 0.0
    %142 = vmatprep.subr.mxu0 0.0
    %143 = vmatpush1.msra.mxu0 0.0
    %144 = vmatprep.subr.mxu0 0.0
    %145 = vmatpush1.msra.mxu0 0.0
    %146 = vmatprep.subr.mxu0 0.0
    %147 = vmatpush1.msra.mxu0 0.0
    %148 = vmatprep.subr.mxu0 0.0
    %149 = vmatpush1.msra.mxu0 0.0
    %150 = vmatprep.subr.mxu0 0.0
    %151 = vmatpush1.msra.mxu0 0.0
    %152 = vmatprep.subr.mxu0 0.0
    %153 = vmatpush1.msra.mxu0 0.0
    %154 = vmatprep.subr.mxu0 0.0
    %155 = vmatpush1.msra.mxu0 0.0
    %156 = vmatprep.subr.mxu0 0.0
    %157 = vmatpush1.msra.mxu0 0.0
    %158 = vmatprep.subr.mxu0 0.0
    %159 = vmatpush1.msra.mxu0 0.0
    %160 = vmatprep.subr.mxu0 0.0
    %161 = vmatpush1.msra.mxu0 0.0
    %162 = vmatprep.subr.mxu0 0.0
    %163 = vmatpush1.msra.mxu0 0.0
    %164 = vmatprep.subr.mxu0 0.0
    %165 = vmatpush1.msra.mxu0 0.0
    %166 = vmatprep.subr.mxu0 0.0
    %167 = vmatpush1.msra.mxu0 0.0
    %168 = vmatprep.subr.mxu0 0.0
    %169 = vmatpush1.msra.mxu0 0.0
    %170 = vmatprep.subr.mxu0 0.0
    %171 = vmatpush1.msra.mxu0 0.0
    %172 = vmatprep.subr.mxu0 0.0
    %173 = vmatpush1.msra.mxu0 0.0
    %174 = vmatprep.mubr.f32.mxu0 0.0
    %175 = vmatmul.mubr.f32.gmra.mrb[0].mxu0 %v105
    %v176 = vpop.f32.mrb[0].mxu0
    %v177 = vadd.f32 %v102, %v176
    %v178 = vpop.f32.mrb[0].mxu0
    %179 = vdwg.mxu0
    %v180 = vtanh.pop %v96
    %v181 = vtanh.pop %v177
    %vm182 = vcmask 49152
    %183 = vst.msk [vmem:[#allocation2] sm:$0x1] %vm182, %v180
    %185 = vset.pattern.permute.xlu0 0
    %186 = vperm.xlu0 %185, %v181
    %v187 = vpop.permute.xlu0 %186
    %v189 = vmul.f32 %v14, %v187
    %vm190 = vcmask 55296
    %v191 = vsel %vm190, %v189, 0.0
    %v192 = vrot.slane %v191, 4
    %v193 = vadd.f32 %v191, %v192
    %v194 = vrot.slane %v193, 2
    %v195 = vadd.f32 %v193, %v194
    %v196 = vrot.slane %v195, 1
    %v197 = vadd.f32 %v195, %v196
    %v198 = vadd.f32 %v197, %v96
    %v199 = vlaneseq
    %v200 = vshrl.u32 %v199, 7
    %v201 = vsub.s32 0, %v200
    %v202 = vrot.slane %v180, %v201
    %v203 = vmul.f32 %v13, %v202
    %v204 = vsel %vm190, %v203, 0.0
    %205 = vadd.xlane.f32.xlu0 %v204
    %v206 = vpop.xlane.xlu0 %205
    %v207 = vadd.f32 %v206, %v177
    %v208 = vtanh.pop %v198
    %v209 = vtanh.pop %v207
    %vm210 = vcmask 50177
    %211 = vst.msk [vmem:[#allocation2] sm:$0x2] %vm210, %v208
    %213 = vset.pattern.permute.xlu0 1
    %214 = vperm.xlu0 %213, %v209
    %v215 = vpop.permute.xlu0 %214
    %v217 = vmul.f32 %v14, %v215
    %v218 = vsel %vm190, %v217, 0.0
    %v219 = vrot.slane %v218, 4
    %v220 = vadd.f32 %v218, %v219
    %v221 = vrot.slane %v220, 2
    %v222 = vadd.f32 %v220, %v221
    %v223 = vrot.slane %v222, 1
    %v224 = vadd.f32 %v222, %v223
    %v225 = vadd.f32 %v224, %v96
    %v226 = vlaneseq
    %v227 = vshrl.u32 %v226, 7
    %v228 = vsub.s32 1, %v227
    %v229 = vrot.slane %v208, %v228
    %v230 = vmul.f32 %v13, %v229
    %v231 = vsel %vm190, %v230, 0.0
    %232 = vadd.xlane.f32.xlu0 %v231
    %v233 = vpop.xlane.xlu0 %232
    %v234 = vadd.f32 %v233, %v177
    %v235 = vtanh.pop %v225
    %v236 = vtanh.pop %v234
    %vm237 = vcmask 51202
    %238 = vst.msk [vmem:[#allocation2] sm:$0x4] %vm237, %v235
    %240 = vset.pattern.permute.xlu0 2
    %241 = vperm.xlu0 %240, %v236
    %v242 = vpop.permute.xlu0 %241
    %v244 = vmul.f32 %v14, %v242
    %v245 = vsel %vm190, %v244, 0.0
    %v246 = vrot.slane %v245, 4
    %v247 = vadd.f32 %v245, %v246
    %v248 = vrot.slane %v247, 2
    %v249 = vadd.f32 %v247, %v248
    %v250 = vrot.slane %v249, 1
    %v251 = vadd.f32 %v249, %v250
    %v252 = vadd.f32 %v251, %v96
    %v253 = vlaneseq
    %v254 = vshrl.u32 %v253, 7
    %v255 = vsub.s32 2, %v254
    %v256 = vrot.slane %v235, %v255
    %v257 = vmul.f32 %v13, %v256
    %v258 = vsel %vm190, %v257, 0.0
    %259 = vadd.xlane.f32.xlu0 %v258
    %v260 = vpop.xlane.xlu0 %259
    %v261 = vadd.f32 %v260, %v177
    %v262 = vtanh.pop %v252
    %v263 = vtanh.pop %v261
    %vm264 = vcmask 52227
    %265 = vst.msk [vmem:[#allocation2] sm:$0x8] %vm264, %v262
    %267 = vset.pattern.permute.xlu0 3
    %268 = vperm.xlu0 %267, %v263
    %v269 = vpop.permute.xlu0 %268
    %v271 = vmul.f32 %v14, %v269
    %v272 = vsel %vm190, %v271, 0.0
    %v273 = vrot.slane %v272, 4
    %v274 = vadd.f32 %v272, %v273
    %v275 = vrot.slane %v274, 2
    %v276 = vadd.f32 %v274, %v275
    %v277 = vrot.slane %v276, 1
    %v278 = vadd.f32 %v276, %v277
    %v279 = vadd.f32 %v278, %v96
    %v280 = vlaneseq
    %v281 = vshrl.u32 %v280, 7
    %v282 = vsub.s32 3, %v281
    %v283 = vrot.slane %v262, %v282
    %v284 = vmul.f32 %v13, %v283
    %v285 = vsel %vm190, %v284, 0.0
    %286 = vadd.xlane.f32.xlu0 %v285
    %v287 = vpop.xlane.xlu0 %286
    %v288 = vadd.f32 %v287, %v177
    %v289 = vtanh.pop %v279
    %v290 = vtanh.pop %v288
    %vm291 = vcmask 53252
    %292 = vst.msk [vmem:[#allocation2] sm:$0x10] %vm291, %v289
    %294 = vset.pattern.permute.xlu0 4
    %295 = vperm.xlu0 %294, %v290
    %v296 = vpop.permute.xlu0 %295
    %v298 = vmul.f32 %v14, %v296
    %v299 = vsel %vm190, %v298, 0.0
    %v300 = vrot.slane %v299, 4
    %v301 = vadd.f32 %v299, %v300
    %v302 = vrot.slane %v301, 2
    %v303 = vadd.f32 %v301, %v302
    %v304 = vrot.slane %v303, 1
    %v305 = vadd.f32 %v303, %v304
    %v306 = vadd.f32 %v305, %v96
    %v307 = vlaneseq
    %v308 = vshrl.u32 %v307, 7
    %v309 = vsub.s32 4, %v308
    %v310 = vrot.slane %v289, %v309
    %v311 = vmul.f32 %v13, %v310
    %v312 = vsel %vm190, %v311, 0.0
    %313 = vadd.xlane.f32.xlu0 %v312
    %v314 = vpop.xlane.xlu0 %313
    %v315 = vadd.f32 %v314, %v177
    %v316 = vtanh.pop %v306
    %v317 = vtanh.pop %v315
    %vm318 = vcmask 54277
    %319 = vst.msk [vmem:[#allocation2] sm:$0x20] %vm318, %v316
    %321 = vset.pattern.permute.xlu0 5
    %322 = vperm.xlu0 %321, %v317
    %v323 = vpop.permute.xlu0 %322
    %v325 = vmul.f32 %v14, %v323
    %v326 = vsel %vm190, %v325, 0.0
    %v327 = vrot.slane %v326, 4
    %v328 = vadd.f32 %v326, %v327
    %v329 = vrot.slane %v328, 2
    %v330 = vadd.f32 %v328, %v329
    %v331 = vrot.slane %v330, 1
    %v332 = vadd.f32 %v330, %v331
    %v333 = vadd.f32 %v332, %v96
    %v334 = vlaneseq
    %v335 = vshrl.u32 %v334, 7
    %v336 = vsub.s32 5, %v335
    %v337 = vrot.slane %v316, %v336
    %v338 = vmul.f32 %v13, %v337
    %v339 = vsel %vm190, %v338, 0.0
    %340 = vadd.xlane.f32.xlu0 %v339
    %v341 = vpop.xlane.xlu0 %340
    %v342 = vadd.f32 %v341, %v177
    %v343 = vtanh.pop %v333
    %v344 = vtanh.pop %v342
    %vm345 = vcmask 55302
    %346 = vst.msk [vmem:[#allocation2] sm:$0x40] %vm345, %v343
    %348 = vset.pattern.permute.xlu0 6
    %349 = vperm.xlu0 %348, %v344
    %v350 = vpop.permute.xlu0 %349
    %v352 = vmul.f32 %v14, %v350
    %v353 = vsel %vm190, %v352, 0.0
    %v354 = vrot.slane %v353, 4
    %v355 = vadd.f32 %v353, %v354
    %v356 = vrot.slane %v355, 2
    %v357 = vadd.f32 %v355, %v356
    %v358 = vrot.slane %v357, 1
    %v359 = vadd.f32 %v357, %v358
    %v360 = vadd.f32 %v359, %v96
    %v361 = vtanh.pop %v360
    %vm362 = vcmask 56327
    %363 = vst.msk [vmem:[#allocation2] sm:$0x80] %vm362, %v361
    // Predicated region
    $region6: #{rnn_forward.1} parent=1 // pred_check
      _
    $region7: #{rnn_forward.1} parent=1 // pred_check_branch
      %365 = sbr.rel (0) target = $region9
    $region8: #{rnn_forward.1} parent=1 // pred_region
      %s367 = ssub.s32 128, 128
      %368 = vsyncadd [#allocation3], %s367
      %s370 = sshll.u32 [#allocation2], 4
      %s371 = int_to_ptr.vmem [resolvable:$true] %s370
      %373 = dma.vmem_to_hbm [thread:$0]  %s371, 128, %s1, [#allocation3]
    $region9: #{rnn_forward.1} parent=1 // pred_fallthru
      _
    // Predicated region
    $region10: #{rnn_forward.1} parent=1 // pred_check
      _
    $region11: #{rnn_forward.1} parent=1 // pred_check_branch
      %375 = sbr.rel (0) target = $region13
    $region12: #{rnn_forward.1} parent=1 // pred_region
      %376 = dma.done [#allocation3], 128
    $region13: #{rnn_forward.1} parent=1 // pred_fallthru
      _
    %377 = vsyncpa [#allocation3], 1

</llo_original>
